<compile_context>
chip_gen: v6e
topology: v6e:2x2x1
jax: 0.10.0
libtpu: 0.0.40
codegen_flags: <defaults>
</compile_context>

<pallas_src>
import functools

import jax
import jax.numpy as jnp
from jax.experimental import pallas as pl
from jax.experimental.pallas import tpu as pltpu


def _round_up(x, m):
    return ((x + m - 1) // m) * m


def _num_tensorcores():
    """Best-effort TensorCores-per-chip (1 on v5e/v6e, 2 on v7x)."""
    try:
        info = pltpu.get_tpu_info()
        for attr in ("num_cores", "core_count", "cores_per_chip", "num_tensorcores"):
            v = getattr(info, attr, None)
            if v:
                return max(1, int(v))
    except Exception:
        pass
    return 1


def _vmem_capacity_bytes():
    try:
        return int(pltpu.get_tpu_info().vmem_capacity_bytes)
    except Exception:
        return 64 << 20            # conservative fallback (v7x per-TC size)


def _mse_w_kernel(logits_ref, target_ref, w_ref, out_ref, acc_ref, *,
                  tile_rows, tile_d, tiles_per_split, d_tiles,
                  n_rows, n_cols, inv_nd, mask_rows, mask_cols):
    c = pl.program_id(0)          # cross-TensorCore split       ("parallel")
    i = pl.program_id(1)          # row tiles within the split   ("arbitrary")
    j = pl.program_id(2)          # D tiles                      ("arbitrary")

    # Zero this split's small accumulator on its first step.
    @pl.when((i == 0) & (j == 0))
    def _():
        acc_ref[...] = jnp.zeros_like(acc_ref)

    # VPU-only hot path: w_r * (l - t)^2 in f32.
    diff = logits_ref[...].astype(jnp.float32) - target_ref[...].astype(jnp.float32)
    w_col = w_ref[...].astype(jnp.float32)                   # (tile_rows, 1)
    contrib = w_col * (diff * diff)                           # (tile_rows, tile_d)

    # Mask ragged tails / phantom tiles.  jnp.where is a select, so garbage
    # (possibly NaN/Inf) out-of-bounds block contents cannot propagate.
    if mask_rows or mask_cols:
        valid = None
        if mask_rows:
            row0 = (c * tiles_per_split + i) * tile_rows      # logical row offset
            rows = jax.lax.broadcasted_iota(jnp.int32, (tile_rows, tile_d), 0) + row0
            valid = rows < n_rows
        if mask_cols:
            col0 = j * tile_d
            cols = jax.lax.broadcasted_iota(jnp.int32, (tile_rows, tile_d), 1) + col0
            cvalid = cols < n_cols
            valid = cvalid if valid is None else (valid & cvalid)
        contrib = jnp.where(valid, contrib, 0.0)

    # Fold tile_rows down to 8 sublanes: axis-0 slabs live in distinct vregs,
    # so this is pure VALU adds; the accumulator RMW stays a single (8, tile_d).
    acc_ref[...] += contrib.reshape(tile_rows // 8, 8, tile_d).sum(axis=0)

    # One cross-lane reduction per split, with the folded 1/(N*D) scale.
    @pl.when((i == tiles_per_split - 1) & (j == d_tiles - 1))
    def _():
        total = jnp.sum(acc_ref[...]) * inv_nd
        out_ref[...] = jnp.full(out_ref.shape, total, dtype=out_ref.dtype)


def mse_w(logits, target, weights, *, num_splits=None, max_rows_per_tile=None):
    """Weighted MSE. logits/target: (N, D); weights: (N,). Returns f32 scalar."""
    n, d = logits.shape
    assert target.shape == (n, d)
    assert weights.shape == (n,)

    isl = jnp.dtype(logits.dtype).itemsize
    ist = jnp.dtype(target.dtype).itemsize
    itemsize = max(isl, ist)

    if num_splits is None:
        num_splits = max(1, min(_num_tensorcores(), 2))

    # ---- Tile sizing (generation-aware, HBM-roofline oriented) --------------
    vmem_cap = _vmem_capacity_bytes()
    vmem_budget = max(24 << 20, (vmem_cap * 3) // 4)
    target_block = 4 << 20          # ~4 MiB per input block per buffer
    max_block = 8 << 20

    # D tiling only for very large D (vocab-sized logits); otherwise full D.
    if d <= 512 or (target_block // (d * itemsize)) >= 64:
        tile_d = d
    else:
        tile_d = max(128, (target_block // (512 * itemsize)) // 128 * 128)
        tile_d = min(tile_d, (d // 128) * 128)
    d_tiles = -(-d // tile_d)

    # Row tile: as many rows as the VMEM budget / per-block cap allow.
    per_row = 2 * tile_d * (isl + ist) + 2 * 128 * 4   # 2 bufs (logits+target) + weights
    fixed = 8 * tile_d * 4 + 2 * 8 * 128 * 4 + (2 << 20)
    rows_by_budget = max(8, (vmem_budget - fixed) // per_row)
    rows_by_cap = max(8, max_block // (tile_d * itemsize))
    tile_rows = min(rows_by_budget, rows_by_cap, _round_up(n, 8))
    if max_rows_per_tile is not None:
        tile_rows = min(tile_rows, max(8, max_rows_per_tile))
    tile_rows = max(8, (tile_rows // 8) * 8)

    # ---- Grid: (splits, row tiles per split, D tiles) ------------------------
    nt_rows = -(-n // tile_rows)                       # real row tiles
    num_splits = max(1, min(num_splits, nt_rows))
    tiles_per_split = -(-nt_rows // num_splits)
    num_splits = -(-nt_rows // tiles_per_split)        # drop empty splits
    clamp_rows = num_splits * tiles_per_split > nt_rows
    mask_rows = num_splits * tiles_per_split * tile_rows != n
    mask_cols = d_tiles * tile_d != d

    def row_blk(c, i):
        idx = c * tiles_per_split + i
        if clamp_rows:
            # Phantom tiles of the last split re-read a valid block; their
            # contribution is fully masked in-kernel (logical row0 >= N).
            idx = jnp.minimum(idx, nt_rows - 1)
        return idx

    kernel = functools.partial(
        _mse_w_kernel,
        tile_rows=tile_rows, tile_d=tile_d,
        tiles_per_split=tiles_per_split, d_tiles=d_tiles,
        n_rows=n, n_cols=d, inv_nd=1.0 / (n * d),
        mask_rows=mask_rows, mask_cols=mask_cols,
    )

    # ---- VMEM request: generation-aware, never below the actual need --------
    need = (2 * tile_rows * tile_d * (isl + ist)    # double-buffered logits+target
            + 2 * tile_rows * 128 * 4               # double-buffered lane-padded weights
            + 8 * tile_d * 4                        # accumulator
            + 2 * 8 * 128 * 4                       # output blocks
            + (4 << 20))                            # slack
    vmem_limit = int(max(need, min(32 << 20, vmem_cap)))
    vmem_limit = min(vmem_limit, max(vmem_cap, need))

    cost = pl.CostEstimate(
        flops=5 * n * d,
        transcendentals=0,
        bytes_accessed=(isl + ist) * n * d + n * 4 + num_splits * 8 * 128 * 4,
    )

    w2d = weights.reshape(n, 1).astype(jnp.float32)

    out = pl.pallas_call(
        kernel,
        out_shape=jax.ShapeDtypeStruct((num_splits, 8, 128), jnp.float32),
        grid_spec=pltpu.PrefetchScalarGridSpec(
            num_scalar_prefetch=0,
            grid=(num_splits, tiles_per_split, d_tiles),
            in_specs=[
                pl.BlockSpec((tile_rows, tile_d), lambda c, i, j: (row_blk(c, i), j)),
                pl.BlockSpec((tile_rows, tile_d), lambda c, i, j: (row_blk(c, i), j)),
                pl.BlockSpec((tile_rows, 1), lambda c, i, j: (row_blk(c, i), 0)),
            ],
            out_specs=pl.BlockSpec((1, 8, 128), lambda c, i, j: (c, 0, 0)),
            scratch_shapes=[pltpu.VMEM((8, tile_d), jnp.float32)],
        ),
        compiler_params=pltpu.CompilerParams(
            dimension_semantics=("parallel", "arbitrary", "arbitrary"),
            vmem_limit_bytes=vmem_limit,
        ),
        cost_estimate=cost,
    )(logits, target, w2d)

    # Sum the per-split partials (each already scaled by 1/(N*D)).
    return jnp.sum(out[:, 0, 0])


if __name__ == "__main__":
    key = jax.random.PRNGKey(0)
    k1, k2, k3 = jax.random.split(key, 3)

    # Small, deliberately ragged shapes (exercise the in-kernel tail masking).
    N, D = 20, 64
    logits = jax.random.normal(k1, (N, D), dtype=jnp.float32)
    target = jax.random.normal(k2, (N, D), dtype=jnp.float32)
    weights = jax.random.uniform(k3, (N,), dtype=jnp.float32)

    # Pure-JAX reference for correctness.
    ref = jnp.mean(jnp.mean((logits - target) ** 2, axis=1) * weights)

    # 1) Auto-configured call (generation-aware tile sizing).
    out = jax.block_until_ready(mse_w(logits, target, weights))
    assert jnp.allclose(out, ref, rtol=1e-5, atol=1e-6), (out, ref)

    # 2) Stress config: tiny row tiles + 2 splits -> multiple row tiles,
    #    phantom-tile clamping and in-kernel row masking all exercised.
    out2 = jax.block_until_ready(
        mse_w(logits, target, weights, num_splits=2, max_rows_per_tile=8))
    assert jnp.allclose(out2, ref, rtol=1e-5, atol=1e-6), (out2, ref)

    print("KERNEL_OK")
</pallas_src>

<mosaic_0001>
module attributes {stable_mosaic.version = 11 : i64} {
  func.func @_mse_w_kernel(%arg0: i32, %arg1: i32, %arg2: i32, %arg3: memref<24x64xf32, #tpu.memory_space<vmem>>, %arg4: memref<24x64xf32, #tpu.memory_space<vmem>>, %arg5: memref<24x1xf32, #tpu.memory_space<vmem>>, %arg6: memref<1x8x128xf32, #tpu.memory_space<vmem>>, %arg7: memref<8x64xf32, #tpu.memory_space<vmem>>) attributes {dimension_semantics = [#tpu.dimension_semantics<parallel>, #tpu.dimension_semantics<arbitrary>, #tpu.dimension_semantics<arbitrary>], iteration_bounds = array<i64: 1, 1, 1>, scalar_prefetch = 0 : i64, scratch_operands = 1 : i64, tpu.core_type = #tpu.core_type<tc>, window_params = [{transform_indices = @transform_0, window_bounds = array<i64: 24, 64>}, {transform_indices = @transform_1, window_bounds = array<i64: 24, 64>}, {transform_indices = @transform_2, window_bounds = array<i64: 24, 1>}, {transform_indices = @transform_3, window_bounds = array<i64: 1, 8, 128>}]} {
    %c0_i32 = arith.constant 0 : i32
    %0 = arith.cmpi eq, %arg1, %c0_i32 : i32
    %c0_i32_0 = arith.constant 0 : i32
    %1 = arith.cmpi eq, %arg2, %c0_i32_0 : i32
    %2 = arith.andi %0, %1 : i1
    %3 = arith.extui %2 : i1 to i32
    %c0_i32_1 = arith.constant 0 : i32
    %4 = arith.cmpi ne, %3, %c0_i32_1 : i32
    scf.if %4 {
      %cst_15 = arith.constant 0.000000e+00 : f32
      %32 = vector.broadcast %cst_15 : f32 to vector<8x64xf32>
      %c0_16 = arith.constant 0 : index
      %c0_17 = arith.constant 0 : index
      %33 = vector.load %arg7[%c0_16, %c0_17] : memref<8x64xf32, #tpu.memory_space<vmem>>, vector<8x64xf32>
      tpu.vector_store %arg7[%c0_16, %c0_17], %32 {strides = array<i32>} : memref<8x64xf32, #tpu.memory_space<vmem>>, vector<8x64xf32>,
    } else {
    }
    %c0 = arith.constant 0 : index
    %c0_2 = arith.constant 0 : index
    %5 = vector.load %arg3[%c0, %c0_2] : memref<24x64xf32, #tpu.memory_space<vmem>>, vector<24x64xf32>
    %c0_3 = arith.constant 0 : index
    %c0_4 = arith.constant 0 : index
    %6 = vector.load %arg4[%c0_3, %c0_4] : memref<24x64xf32, #tpu.memory_space<vmem>>, vector<24x64xf32>
    %7 = arith.subf %5, %6 : vector<24x64xf32>
    %c0_5 = arith.constant 0 : index
    %c0_6 = arith.constant 0 : index
    %8 = vector.load %arg5[%c0_5, %c0_6] : memref<24x1xf32, #tpu.memory_space<vmem>>, vector<24x1xf32>
    %9 = arith.mulf %7, %7 : vector<24x64xf32>
    %10 = vector.broadcast %8 : vector<24x1xf32> to vector<24x64xf32>
    %11 = arith.mulf %10, %9 : vector<24x64xf32>
    %c1_i32 = arith.constant 1 : i32
    %12 = arith.muli %arg0, %c1_i32 : i32
    %13 = arith.addi %12, %arg1 : i32
    %c24_i32 = arith.constant 24 : i32
    %14 = arith.muli %13, %c24_i32 : i32
    %15 = tpu.iota {dimensions = array<i32: 0>} : vector<24x64xi32>
    %16 = vector.broadcast %14 : i32 to vector<24x64xi32>
    %17 = arith.addi %15, %16 : vector<24x64xi32>
    %c20_i32 = arith.constant 20 : i32
    %18 = vector.broadcast %c20_i32 : i32 to vector<24x64xi32>
    %19 = arith.cmpi slt, %17, %18 : vector<24x64xi32>
    %cst = arith.constant 0.000000e+00 : f32
    %20 = vector.broadcast %cst : f32 to vector<24x64xf32>
    %21 = arith.select %19, %11, %20 : vector<24x64xi1>, vector<24x64xf32>
    %c0_7 = arith.constant 0 : index
    %c0_8 = arith.constant 0 : index
    %22 = vector.load %arg7[%c0_7, %c0_8] : memref<8x64xf32, #tpu.memory_space<vmem>>, vector<8x64xf32>
    %23 = vector.shape_cast %21 : vector<24x64xf32> to vector<3x8x64xf32>
    %cst_9 = arith.constant dense<0.000000e+00> : vector<8x64xf32>
    %24 = vector.multi_reduction <add>, %23, %cst_9 [0] : vector<3x8x64xf32> to vector<8x64xf32>
    %25 = arith.addf %22, %24 : vector<8x64xf32>
    %c0_10 = arith.constant 0 : index
    %c0_11 = arith.constant 0 : index
    %26 = vector.load %arg7[%c0_10, %c0_11] : memref<8x64xf32, #tpu.memory_space<vmem>>, vector<8x64xf32>
    tpu.vector_store %arg7[%c0_10, %c0_11], %25 {strides = array<i32>} : memref<8x64xf32, #tpu.memory_space<vmem>>, vector<8x64xf32>,
    %c0_i32_12 = arith.constant 0 : i32
    %27 = arith.cmpi eq, %arg1, %c0_i32_12 : i32
    %c0_i32_13 = arith.constant 0 : i32
    %28 = arith.cmpi eq, %arg2, %c0_i32_13 : i32
    %29 = arith.andi %27, %28 : i1
    %30 = arith.extui %29 : i1 to i32
    %c0_i32_14 = arith.constant 0 : i32
    %31 = arith.cmpi ne, %30, %c0_i32_14 : i32
    scf.if %31 {
      %c0_15 = arith.constant 0 : index
      %c0_16 = arith.constant 0 : index
      %32 = vector.load %arg7[%c0_15, %c0_16] : memref<8x64xf32, #tpu.memory_space<vmem>>, vector<8x64xf32>
      %33 = vector.shape_cast %32 : vector<8x64xf32> to vector<1x8x64xf32>
      %cst_17 = arith.constant dense<0.000000e+00> : vector<1xf32>
      %34 = vector.multi_reduction <add>, %33, %cst_17 [1, 2] : vector<1x8x64xf32> to vector<1xf32>
      %35 = vector.shape_cast %34 : vector<1xf32> to vector<1x1x1xf32>
      %36 = vector.extract %35[0, 0, 0] : f32 from vector<1x1x1xf32>
      %cst_18 = arith.constant 7.812500e-04 : f32
      %37 = arith.mulf %36, %cst_18 : f32
      %38 = vector.broadcast %37 : f32 to vector<1x8x128xf32>
      %c0_19 = arith.constant 0 : index
      %c0_20 = arith.constant 0 : index
      %c0_21 = arith.constant 0 : index
      %39 = vector.load %arg6[%c0_19, %c0_20, %c0_21] : memref<1x8x128xf32, #tpu.memory_space<vmem>>, vector<1x8x128xf32>
      tpu.vector_store %arg6[%c0_19, %c0_20, %c0_21], %38 {strides = array<i32>} : memref<1x8x128xf32, #tpu.memory_space<vmem>>, vector<1x8x128xf32>,
    } else {
    }
    return
  }
  func.func @transform_0(%arg0: i32, %arg1: i32, %arg2: i32) -> (i32, i32) {
    %c1_i32 = arith.constant 1 : i32
    %0 = arith.muli %arg0, %c1_i32 : i32
    %1 = arith.addi %0, %arg1 : i32
    %c0_i32 = arith.constant 0 : i32
    return %1, %arg2 : i32, i32
  }
  func.func @transform_1(%arg0: i32, %arg1: i32, %arg2: i32) -> (i32, i32) {
    %c1_i32 = arith.constant 1 : i32
    %0 = arith.muli %arg0, %c1_i32 : i32
    %1 = arith.addi %0, %arg1 : i32
    %c0_i32 = arith.constant 0 : i32
    return %1, %arg2 : i32, i32
  }
  func.func @transform_2(%arg0: i32, %arg1: i32, %arg2: i32) -> (i32, i32) {
    %c1_i32 = arith.constant 1 : i32
    %0 = arith.muli %arg0, %c1_i32 : i32
    %1 = arith.addi %0, %arg1 : i32
    %c0_i32 = arith.constant 0 : i32
    %c0_i32_0 = arith.constant 0 : i32
    return %1, %c0_i32 : i32, i32
  }
  func.func @transform_3(%arg0: i32, %arg1: i32, %arg2: i32) -> (i32, i32, i32) {
    %c0_i32 = arith.constant 0 : i32
    %c0_i32_0 = arith.constant 0 : i32
    %c0_i32_1 = arith.constant 0 : i32
    return %arg0, %c0_i32, %c0_i32_0 : i32, i32, i32
  }
}

</mosaic_0001>

<llo_original>
// kernel: tpu_custom_call.1
$region0: #{tpu_custom_call.1}
  #allocation0 [shape = 'u32[]', space=smem, size = 0x4, offset = 0x4, fixed_abs, tag = 'smem constant byte address 0x4 - core index']
  #allocation1 [shape = 'u32[144,128]{1,0:T(1,128)}', space=vmem, size = 0x12000, scoped, tag = 'internal scratch']
  #allocation2 [shape = 'f32[8,64]{1,0:T(8,128)}', space=vmem, size = 0x1000, scoped, tag = 'scratch operand']
  %s0 = inlined_call_operand.vmem [shape: f32[20,64], index: 0, kind: input, shape index: {}]
  %s1 = inlined_call_operand.hbm [shape: f32[20,64], index: 1, kind: input, shape index: {}]
  %s2 = inlined_call_operand.vmem [shape: f32[20,1], index: 2, kind: input, shape index: {}]
  %s3 = inlined_call_operand.hbm [shape: f32[1,8,128], index: 3, kind: output, shape index: {}]
  %s4 = sld [smem:[#allocation0]]
  $region34: #{tpu_custom_call.1} parent=0
    _
  %s6 = ssub.s32 1, %s4
  %s7 = scalar_select 0, %s6, %s4
  $region1: #{tpu_custom_call.1} parent=0
    #allocation3 [shape = 'u8[12288]{0}', space=vmem, size = 0x3000, scoped, tag = 'input window, operand 1, single buffered']
    #allocation4 [shape = 's32[1]{0}', space=sflag, size = 0x4, scoped, tag = 'scoped memory for tpu_custom_call.1']
    #allocation5 [shape = 's32[1]{0}', space=sflag, size = 0x4, scoped, tag = 'scoped memory for tpu_custom_call.1']
    #allocation6 [shape = 'u8[4096]{0}', space=vmem, size = 0x1000, scoped, tag = 'output window, operand 0, single buffered']
    %8 = vsyncpa [#allocation4], 0
    %9 = vsyncpa [#allocation5], 0
    // Predicated region
    $region2: #{tpu_custom_call.1} parent=1 // pred_check
      _
    $region3: #{tpu_custom_call.1} parent=1 // pred_check_branch
      %11 = sbr.rel (0) target = $region5
    $region4: #{tpu_custom_call.1} parent=1 // pred_region
      %s12 = sadd.s32 0, 0
      %s13 = smul.u32 3, %s12
      %p14 = scmp.lt.s32.totalorder %s13, 2
      %s15 = scalar_select %p14, %s13, 2
      %s16 = smul.addr %s15, 8
      %s17 = scalar_lea.vmem %s0, %s16
      %s18 = sadd.s32 0, 0
      %s19 = smul.u32 3, %s18
    $region5: #{tpu_custom_call.1} parent=1 // pred_fallthru
      _
    // Predicated region
    $region6: #{tpu_custom_call.1} parent=1 // pred_check
      _
    $region7: #{tpu_custom_call.1} parent=1 // pred_check_branch
      %21 = sbr.rel (0) target = $region9
    $region8: #{tpu_custom_call.1} parent=1 // pred_region
      %s22 = sadd.s32 0, 0
      %s23 = smul.u32 3, %s22
      %s25 = ssub.s32 384, 384
      %26 = vsyncadd [#allocation4], %s25
      %s27 = smul.addr %s23, 128
      %s28 = scalar_lea.hbm %s1, %s27
      %s29 = sshll.u32 [#allocation3], 4
      %s30 = int_to_ptr.vmem [resolvable:$true] %s29
      %35 = dma.hbm_to_vmem [thread:$0]  %s28, 384, %s30, [#allocation4], 128, 128, 8
    $region9: #{tpu_custom_call.1} parent=1 // pred_fallthru
      _
    // Predicated region
    $region10: #{tpu_custom_call.1} parent=1 // pred_check
      _
    $region11: #{tpu_custom_call.1} parent=1 // pred_check_branch
      %37 = sbr.rel (0) target = $region13
    $region12: #{tpu_custom_call.1} parent=1 // pred_region
      %s38 = sadd.s32 0, 0
      %s39 = smul.u32 3, %s38
      %p40 = scmp.lt.s32.totalorder %s39, 2
      %s41 = scalar_select %p40, %s39, 2
      %s42 = smul.addr %s41, 8
      %s43 = scalar_lea.vmem %s2, %s42
      %s44 = sadd.s32 0, 0
      %s45 = smul.u32 3, %s44
    $region13: #{tpu_custom_call.1} parent=1 // pred_fallthru
      _
    // Predicated region
    $region14: #{tpu_custom_call.1} parent=1 // pred_check
      _
    $region15: #{tpu_custom_call.1} parent=1 // pred_check_branch
      %47 = sbr.rel (0) target = $region17
    $region16: #{tpu_custom_call.1} parent=1 // pred_region
      %48 = dma.done [#allocation4], 384
    $region17: #{tpu_custom_call.1} parent=1 // pred_fallthru
      _
    %s49 = sadd.s32 0, 0
    %s50 = smul.u32 3, %s49
    %p51 = scmp.lt.s32.totalorder %s50, 2
    %s52 = scalar_select %p51, %s50, 2
    %s53 = smul.addr %s52, 8
    %s54 = scalar_lea.vmem %s0, %s53
    %s55 = sadd.s32 0, 0
    %s56 = smul.u32 3, %s55
    %p57 = scmp.lt.s32.totalorder %s56, 2
    %s58 = scalar_select %p57, %s56, 2
    %s59 = smul.addr %s58, 8
    %s60 = scalar_lea.vmem %s2, %s59
    %s61 = sadd.s32 0, 0
    %s62 = smul.u32 3, %s61
    %p63 = scmp.lt.s32.totalorder %s62, 2
    %s64 = scalar_select %p63, %s62, 2
    %s65 = smul.addr %s64, 8
    %s66 = scalar_lea.vmem %s0, %s65
    %s67 = sadd.s32 0, 0
    %s68 = smul.u32 3, %s67
    %s69 = sadd.s32 0, 0
    %s70 = smul.u32 3, %s69
    %s71 = sadd.s32 0, 0
    %s72 = smul.u32 3, %s71
    %p73 = scmp.lt.s32.totalorder %s72, 2
    %s74 = scalar_select %p73, %s72, 2
    %s75 = smul.addr %s74, 8
    %s76 = scalar_lea.vmem %s2, %s75
    %s77 = sadd.s32 0, 0
    %s78 = smul.u32 3, %s77
    %p79 = scmp.eq.s32.totalorder 0, 0
    %p80 = scmp.eq.s32.totalorder 0, 0
    %p81 = pnand %p79, %p80
    %p82 = pneg %p81
    // Predicated region
    $region18: #{tpu_custom_call.1} parent=1 // pred_check
      _
    $region19: #{tpu_custom_call.1} parent=1 // pred_check_branch
      %84 = sbr.rel (%p81) target = $region21
    $region20: #{tpu_custom_call.1} parent=1 // pred_region
      %vm85 = vcmask 523264
      %86 = vst.msk [vmem:[#allocation2] sm:$0xff] %vm85, 0.0
    $region21: #{tpu_custom_call.1} parent=1 // pred_fallthru
      _
    %v87 = vld [vmem:[%s66] sm:$0xff]
    %v88 = vld [vmem:[%s66 + $0x8] sm:$0xff]
    %v89 = vld [vmem:[%s66 + $0x10] sm:$0xff]
    %v90 = vld [vmem:[#allocation3] sm:$0xff]
    %v91 = vld [vmem:[#allocation3 + $0x8] sm:$0xff]
    %v92 = vld [vmem:[#allocation3 + $0x10] sm:$0xff]
    %v93 = vsub.f32 %v87, %v90
    %v94 = vsub.f32 %v88, %v91
    %v95 = vsub.f32 %v89, %v92
    %v96 = vld [vmem:[%s76] sm:$0xff]
    %v97 = vld [vmem:[%s76 + $0x8] sm:$0xff]
    %v98 = vld [vmem:[%s76 + $0x10] sm:$0xff]
    %v99 = vmul.f32 %v93, %v93
    %v100 = vmul.f32 %v94, %v94
    %v101 = vmul.f32 %v95, %v95
    %103 = vset.pattern.permute.xlu0 0
    %104 = vperm.xlu0 %103, %v96
    %v105 = vpop.permute.xlu0 %104
    %108 = vset.pattern.permute.xlu0 0
    %109 = vperm.xlu0 %108, %v97
    %v110 = vpop.permute.xlu0 %109
    %113 = vset.pattern.permute.xlu0 0
    %114 = vperm.xlu0 %113, %v98
    %v115 = vpop.permute.xlu0 %114
    %v117 = vmul.f32 %v105, %v99
    %v118 = vmul.f32 %v110, %v100
    %v119 = vmul.f32 %v115, %v101
    %s120 = sadd.s32 0, 0
    %s121 = smul.u32 %s120, 24
    %v122 = vlaneseq
    %v123 = vshrl.u32 %v122, 7
    %v124 = vadd.s32 %v123, 8
    %v125 = vadd.s32 %v123, 16
    %v126 = vstv %s121
    %v127 = vadd.s32 %v123, %v126
    %v128 = vadd.s32 %v124, %v126
    %v129 = vadd.s32 %v125, %v126
    %vm130 = vcmp.lt.s32.totalorder %v127, 20
    %vm131 = vcmp.lt.s32.totalorder %v128, 20
    %vm132 = vcmp.lt.s32.totalorder %v129, 20
    %v133 = vsel %vm130, %v117, 0.0
    %v134 = vsel %vm131, %v118, 0.0
    %v135 = vsel %vm132, %v119, 0.0
    %v136 = vld [vmem:[#allocation2] sm:$0xff]
    %vm137 = vcmask 523264
    %v138 = vsel %vm137, %v133, 0.0
    %v139 = vsel %vm137, %v134, 0.0
    %v140 = vadd.f32 %v138, %v139
    %v141 = vsel %vm137, %v135, 0.0
    %v142 = vadd.f32 %v140, %v141
    %v143 = vadd.f32 %v136, %v142
    %144 = vst.msk [vmem:[#allocation2] sm:$0xff] %vm137, %v143
    // Predicated region
    $region22: #{tpu_custom_call.1} parent=1 // pred_check
      _
    $region23: #{tpu_custom_call.1} parent=1 // pred_check_branch
      %146 = sbr.rel (%p81) target = $region25
    $region24: #{tpu_custom_call.1} parent=1 // pred_region
      %v147 = vld [vmem:[#allocation2] sm:$0xff]
      %v148 = vsel %vm137, %v147, 0.0
      %149 = vadd.xlane.f32.xlu0 %v148
      %v150 = vpop.xlane.xlu0 %149
      %v151 = vrot.slane %v150, 4
      %v152 = vadd.f32 %v150, %v151
      %v153 = vrot.slane %v152, 2
      %v154 = vadd.f32 %v152, %v153
      %v155 = vrot.slane %v154, 1
      %v156 = vadd.f32 %v154, %v155
      %s157 = vtos %v156
      %s158 = smul.f32 %s157, 0.00078125
      %v159 = vstv %s158
      %160 = vst [vmem:[#allocation6] sm:$0xff] %v159
    $region25: #{tpu_custom_call.1} parent=1 // pred_fallthru
      _
    // Predicated region
    $region26: #{tpu_custom_call.1} parent=1 // pred_check
      _
    $region27: #{tpu_custom_call.1} parent=1 // pred_check_branch
      %162 = sbr.rel (0) target = $region29
    $region28: #{tpu_custom_call.1} parent=1 // pred_region
      %s164 = ssub.s32 128, 128
      %165 = vsyncadd [#allocation5], %s164
      %s167 = sshll.u32 [#allocation6], 4
      %s168 = int_to_ptr.vmem [resolvable:$true] %s167
      %170 = dma.vmem_to_hbm [thread:$0]  %s168, 128, %s3, [#allocation5]
    $region29: #{tpu_custom_call.1} parent=1 // pred_fallthru
      _
    // Predicated region
    $region30: #{tpu_custom_call.1} parent=1 // pred_check
      _
    $region31: #{tpu_custom_call.1} parent=1 // pred_check_branch
      %172 = sbr.rel (0) target = $region33
    $region32: #{tpu_custom_call.1} parent=1 // pred_region
      %173 = dma.done [#allocation5], 128
    $region33: #{tpu_custom_call.1} parent=1 // pred_fallthru
      _
    %174 = vsyncpa [#allocation4], 1
    %175 = vsyncpa [#allocation5], 1

</llo_original>
